<compile_context>
chip_gen: v5e
topology: v5e:2x2
jax: 0.10.0
libtpu: 0.0.40
codegen_flags: <defaults>
</compile_context>

<pallas_src>
import functools
from math import sqrt

import jax
import jax.numpy as jnp
from jax import lax
from jax.experimental import pallas as pl
from jax.experimental.pallas import tpu as pltpu  # noqa: F401  (TPU backend / memory spaces)


def _round_up(x, m):
    return ((x + m - 1) // m) * m


def _med_pose_att_kernel(qx_ref, cx_ref, w_ref, out_ref, res_ref, *,
                         batch, q_len, kv_len, query_dim, key_dim,
                         num_heads, head_dim, model_dim):
    HD = num_heads * head_dim

    qx = qx_ref[...]                                   # (B*Lq, query_dim)
    cx = cx_ref[...]                                   # (B*Lk, key_dim)

    # Packed weight slab: all slices below are leading-index / sublane /
    # lane-0-anchored picks (no lane rotates).
    wq = w_ref[0, :query_dim, :HD]                     # (qd, HD)
    bq = w_ref[0, query_dim:query_dim + 1, :HD]        # (1, HD)
    wkv = w_ref[1, :key_dim, :2 * HD]                  # (kd, 2*HD)  K half pre-scaled
    bkv = w_ref[1, key_dim:key_dim + 1, :2 * HD]       # (1, 2*HD)
    wo = w_ref[2, :HD, :model_dim]                     # (HD, model_dim)
    bo = w_ref[2, HD:HD + 1, :model_dim]               # (1, model_dim)

    # Batched projections: both batches + all heads in one MXU op each.
    q_all = jnp.dot(qx, wq, preferred_element_type=jnp.float32) + bq       # (B*Lq, HD)
    kv_all = jnp.dot(cx, wkv, preferred_element_type=jnp.float32) + bkv    # (B*Lk, 2*HD)

    # Residual output = un-scaled q (head-major columns), stored per batch
    # (sublane-aligned slices, Lq is a multiple of 8).
    for b in range(batch):
        res_ref[b] = q_all[b * q_len:(b + 1) * q_len, :].astype(res_ref.dtype)

    accs = [jnp.zeros((q_len, model_dim), jnp.float32) for _ in range(batch)]

    for h in range(num_heads):                          # static unroll (small)
        lo, hi = h * head_dim, (h + 1) * head_dim
        q_h = q_all[:, lo:hi]                           # (B*Lq, Dh)
        k_h = kv_all[:, lo:hi]                          # (B*Lk, Dh), 1/sqrt(Dh) folded in
        v_h = kv_all[:, HD + lo:HD + hi]                # (B*Lk, Dh)

        # Re-associated output projection, batched over both batches:
        #   concat_h(att_h @ v_h) @ Wo == sum_h att_h @ (v_h @ Wo_h)
        vwo_h = jnp.dot(v_h, wo[lo:hi, :],
                        preferred_element_type=jnp.float32)                # (B*Lk, md)

        for b in range(batch):
            qs, ks = b * q_len, b * kv_len
            # q_h_b @ k_h_b.T via the NT dot_general form (no explicit transpose);
            # this is the same contraction pattern the official Pallas
            # flash-attention kernel uses for q @ k^T.
            scores = lax.dot_general(
                q_h[qs:qs + q_len, :], k_h[ks:ks + kv_len, :],
                (((1,), (1,)), ((), ())),
                preferred_element_type=jnp.float32)                        # (Lq, Lk)

            # NOTE: the torch module applies nn.Softmax(dim=1) to the
            # (B, Lq, Lk) score tensor, i.e. softmax over the QUERY axis
            # (axis 0 here), not the usual key axis. Reproduced exactly.
            m = jnp.max(scores, axis=0, keepdims=True)
            e = jnp.exp(scores - m)
            att = e * pl.reciprocal(jnp.sum(e, axis=0, keepdims=True), approx=True)

            accs[b] = accs[b] + jnp.dot(att, vwo_h[ks:ks + kv_len, :],
                                        preferred_element_type=jnp.float32)

    for b in range(batch):
        out_ref[b] = (accs[b] + bo).astype(out_ref.dtype)


def prepare_params(params, *, num_heads, head_dim, model_dim):
    """One-time parameter packing (hoist out of the per-call forward path).

    Returns a single (3, R, C) f32 slab:
      slab 0: rows[:qd]      = Wq (qd, H*Dh)             row[qd]     = bq
      slab 1: rows[:kd]      = [Wk*scale | Wv] (kd, 2HD) row[kd]     = [bk*scale | bv]
      slab 2: rows[:H*Dh]    = Wo (H*Dh, model_dim)      row[H*Dh]   = bo
    1/sqrt(head_dim) is folded into the K weights/bias only.
    """
    wq, bq, wk, bk, wv, bv, wo, bo = params
    HD = num_heads * head_dim
    qd, kd = wq.shape[1], wk.shape[1]
    scale = 1.0 / sqrt(head_dim)

    wq_p = jnp.transpose(wq, (1, 0, 2)).reshape(qd, HD)
    wk_p = jnp.transpose(wk * scale, (1, 0, 2)).reshape(kd, HD)
    wv_p = jnp.transpose(wv, (1, 0, 2)).reshape(kd, HD)

    rows = _round_up(max(qd, kd, HD) + 1, 8)
    cols = max(2 * HD, model_dim)
    w_pack = jnp.zeros((3, rows, cols), jnp.float32)
    w_pack = w_pack.at[0, :qd, :HD].set(wq_p.astype(jnp.float32))
    w_pack = w_pack.at[0, qd, :HD].set(bq.reshape(-1).astype(jnp.float32))
    w_pack = w_pack.at[1, :kd, :HD].set(wk_p.astype(jnp.float32))
    w_pack = w_pack.at[1, :kd, HD:2 * HD].set(wv_p.astype(jnp.float32))
    w_pack = w_pack.at[1, kd, :HD].set((bk * scale).reshape(-1).astype(jnp.float32))
    w_pack = w_pack.at[1, kd, HD:2 * HD].set(bv.reshape(-1).astype(jnp.float32))
    w_pack = w_pack.at[2, :HD, :model_dim].set(wo.astype(jnp.float32))
    w_pack = w_pack.at[2, HD, :model_dim].set(bo.reshape(-1).astype(jnp.float32))
    return w_pack


def med_pose_attention(queries, context, w_pack, *, num_heads, head_dim, model_dim):
    """Forward wrapper. queries: (B, Lq, *spatial); context: (B, Lk, key_dim).
    w_pack must come from prepare_params (packed once, outside this path)."""
    B, Lq = queries.shape[0], queries.shape[1]
    Lk, key_dim = context.shape[1], context.shape[2]
    queries2 = queries.reshape(B * Lq, -1).astype(jnp.float32)   # free (contiguous) reshape
    context2 = context.reshape(B * Lk, key_dim).astype(jnp.float32)
    query_dim = queries2.shape[1]
    HD = num_heads * head_dim

    kernel = functools.partial(
        _med_pose_att_kernel,
        batch=B, q_len=Lq, kv_len=Lk, query_dim=query_dim, key_dim=key_dim,
        num_heads=num_heads, head_dim=head_dim, model_dim=model_dim)

    out, res = pl.pallas_call(
        kernel,
        out_shape=(jax.ShapeDtypeStruct((B, Lq, model_dim), jnp.float32),
                   jax.ShapeDtypeStruct((B, Lq, HD), jnp.float32)),
        grid=(1,),   # single step: whole problem in one invocation / one TC
        in_specs=[
            pl.BlockSpec((B * Lq, query_dim), lambda i: (0, 0)),
            pl.BlockSpec((B * Lk, key_dim), lambda i: (0, 0)),
            pl.BlockSpec(w_pack.shape, lambda i: (0, 0, 0)),
        ],
        out_specs=(
            pl.BlockSpec((B, Lq, model_dim), lambda i: (0, 0, 0)),
            pl.BlockSpec((B, Lq, HD), lambda i: (0, 0, 0)),
        ),
    )(queries2, context2, w_pack)
    return out, res


def _reference(queries, context, params, *, num_heads, head_dim):
    """Pure-JAX reference mirroring the torch forward exactly."""
    wq, bq, wk, bk, wv, bv, wo, bo = params
    B, Lq = queries.shape[0], queries.shape[1]
    queries = queries.reshape(B, Lq, -1)
    outs, qs = [], []
    for h in range(num_heads):
        q = queries @ wq[h] + bq[h]
        k = context @ wk[h] + bk[h]
        v = context @ wv[h] + bv[h]
        scores = jnp.einsum('bqd,bkd->bqk', q, k) / sqrt(head_dim)
        att = jax.nn.softmax(scores, axis=1)       # softmax over query axis (dim=1)
        outs.append(jnp.einsum('bqk,bkd->bqd', att, v))
        qs.append(q)
    att_cat = jnp.concatenate(outs, axis=-1)
    res = jnp.concatenate(qs, axis=-1)
    return att_cat @ wo + bo[0], res


if __name__ == "__main__":
    # Small shapes consistent with the module:
    B, Lq, Lk = 2, 8, 8
    Hs = Ws = 4                     # spatial dims of query features -> query_dim = 16
    query_dim = Hs * Ws
    key_dim = value_dim = 16        # context feature dim (keys & values from same context)
    model_dim = 32
    num_heads = 4
    head_dim = model_dim // num_heads   # 8

    key = jax.random.PRNGKey(0)
    ks = jax.random.split(key, 10)

    queries = jax.random.normal(ks[0], (B, Lq, Hs, Ws), jnp.float32)
    context = jax.random.normal(ks[1], (B, Lk, key_dim), jnp.float32)

    # Deterministic synthetic parameters (already in (in_dim, out_dim) layout).
    wq = 0.1 * jax.random.normal(ks[2], (num_heads, query_dim, head_dim), jnp.float32)
    bq = 0.1 * jax.random.normal(ks[3], (num_heads, head_dim), jnp.float32)
    wk = 0.1 * jax.random.normal(ks[4], (num_heads, key_dim, head_dim), jnp.float32)
    bk = 0.1 * jax.random.normal(ks[5], (num_heads, head_dim), jnp.float32)
    wv = 0.1 * jax.random.normal(ks[6], (num_heads, value_dim, head_dim), jnp.float32)
    bv = 0.1 * jax.random.normal(ks[7], (num_heads, head_dim), jnp.float32)
    wo = 0.1 * jax.random.normal(ks[8], (num_heads * head_dim, model_dim), jnp.float32)
    bo = 0.1 * jax.random.normal(ks[9], (1, model_dim), jnp.float32)
    params = (wq, bq, wk, bk, wv, bv, wo, bo)

    # One-time parameter packing, hoisted out of the forward path.
    w_pack = jax.block_until_ready(
        prepare_params(params, num_heads=num_heads, head_dim=head_dim,
                       model_dim=model_dim))

    fwd = jax.jit(functools.partial(
        med_pose_attention, num_heads=num_heads, head_dim=head_dim,
        model_dim=model_dim))

    out, residual = fwd(queries, context, w_pack)
    out = jax.block_until_ready(out)
    residual = jax.block_until_ready(residual)

    ref_out, ref_res = _reference(queries, context, params,
                                  num_heads=num_heads, head_dim=head_dim)
    assert out.shape == (B, Lq, model_dim)
    assert residual.shape == (B, Lq, num_heads * head_dim)
    # Residual path is exact f32 matmul + bias.
    assert jnp.allclose(residual, ref_res, atol=1e-4, rtol=1e-4)
    # Output path uses the EUP approx reciprocal in the softmax -> slightly
    # looser tolerance (approx rcp relative error << 1e-3).
    assert jnp.allclose(out, ref_out, atol=2e-3, rtol=2e-3)

    print("KERNEL_OK")
</pallas_src>

<mosaic_0001>
module attributes {stable_mosaic.version = 11 : i64} {
  func.func @_med_pose_att_kernel(%arg0: i32, %arg1: memref<16x16xf32, #tpu.memory_space<vmem>>, %arg2: memref<16x16xf32, #tpu.memory_space<vmem>>, %arg3: memref<3x40x64xf32, #tpu.memory_space<vmem>>, %arg4: memref<2x8x32xf32, #tpu.memory_space<vmem>>, %arg5: memref<2x8x32xf32, #tpu.memory_space<vmem>>) attributes {dimension_semantics = [#tpu.dimension_semantics<arbitrary>], iteration_bounds = array<i64: 1>, scalar_prefetch = 0 : i64, scratch_operands = 0 : i64, tpu.core_type = #tpu.core_type<tc>, window_params = [{pipeline_mode = #tpu.pipeline_mode<synchronous>, transform_indices = @transform_0, window_bounds = array<i64: 16, 16>}, {pipeline_mode = #tpu.pipeline_mode<synchronous>, transform_indices = @transform_1, window_bounds = array<i64: 16, 16>}, {pipeline_mode = #tpu.pipeline_mode<synchronous>, transform_indices = @transform_2, window_bounds = array<i64: 3, 40, 64>}, {pipeline_mode = #tpu.pipeline_mode<synchronous>, transform_indices = @transform_3, window_bounds = array<i64: 2, 8, 32>}, {pipeline_mode = #tpu.pipeline_mode<synchronous>, transform_indices = @transform_4, window_bounds = array<i64: 2, 8, 32>}]} {
    %c0 = arith.constant 0 : index
    %c0_0 = arith.constant 0 : index
    %0 = vector.load %arg1[%c0, %c0_0] : memref<16x16xf32, #tpu.memory_space<vmem>>, vector<16x16xf32>
    %c0_1 = arith.constant 0 : index
    %c0_2 = arith.constant 0 : index
    %1 = vector.load %arg2[%c0_1, %c0_2] : memref<16x16xf32, #tpu.memory_space<vmem>>, vector<16x16xf32>
    %c0_3 = arith.constant 0 : index
    %c0_4 = arith.constant 0 : index
    %c0_5 = arith.constant 0 : index
    %2 = vector.load %arg3[%c0_3, %c0_4, %c0_5] : memref<3x40x64xf32, #tpu.memory_space<vmem>>, vector<1x16x32xf32>
    %3 = vector.shape_cast %2 : vector<1x16x32xf32> to vector<16x32xf32>
    %c0_6 = arith.constant 0 : index
    %c16 = arith.constant 16 : index
    %c0_7 = arith.constant 0 : index
    %4 = vector.load %arg3[%c0_6, %c16, %c0_7] : memref<3x40x64xf32, #tpu.memory_space<vmem>>, vector<1x1x32xf32>
    %5 = vector.shape_cast %4 : vector<1x1x32xf32> to vector<1x32xf32>
    %c1 = arith.constant 1 : index
    %c0_8 = arith.constant 0 : index
    %c0_9 = arith.constant 0 : index
    %6 = vector.load %arg3[%c1, %c0_8, %c0_9] : memref<3x40x64xf32, #tpu.memory_space<vmem>>, vector<1x16x64xf32>
    %7 = vector.shape_cast %6 : vector<1x16x64xf32> to vector<16x64xf32>
    %c1_10 = arith.constant 1 : index
    %c16_11 = arith.constant 16 : index
    %c0_12 = arith.constant 0 : index
    %8 = vector.load %arg3[%c1_10, %c16_11, %c0_12] : memref<3x40x64xf32, #tpu.memory_space<vmem>>, vector<1x1x64xf32>
    %9 = vector.shape_cast %8 : vector<1x1x64xf32> to vector<1x64xf32>
    %c2 = arith.constant 2 : index
    %c0_13 = arith.constant 0 : index
    %c0_14 = arith.constant 0 : index
    %10 = vector.load %arg3[%c2, %c0_13, %c0_14] : memref<3x40x64xf32, #tpu.memory_space<vmem>>, vector<1x32x32xf32>
    %11 = vector.shape_cast %10 : vector<1x32x32xf32> to vector<32x32xf32>
    %c2_15 = arith.constant 2 : index
    %c32 = arith.constant 32 : index
    %c0_16 = arith.constant 0 : index
    %12 = vector.load %arg3[%c2_15, %c32, %c0_16] : memref<3x40x64xf32, #tpu.memory_space<vmem>>, vector<1x1x32xf32>
    %13 = vector.shape_cast %12 : vector<1x1x32xf32> to vector<1x32xf32>
    %cst = arith.constant dense<0.000000e+00> : vector<16x32xf32>
    %14 = tpu.matmul %0, %3, %cst {dimension_numbers = #tpu.dot_dimension_numbers<[1], [0], [0], [1], [0, 0, 1, 1], [], []>} : vector<16x16xf32>, vector<16x32xf32>, vector<16x32xf32> -> vector<16x32xf32>
    %15 = vector.broadcast %5 : vector<1x32xf32> to vector<16x32xf32>
    %16 = arith.addf %14, %15 : vector<16x32xf32>
    %cst_17 = arith.constant dense<0.000000e+00> : vector<16x64xf32>
    %17 = tpu.matmul %1, %7, %cst_17 {dimension_numbers = #tpu.dot_dimension_numbers<[1], [0], [0], [1], [0, 0, 1, 1], [], []>} : vector<16x16xf32>, vector<16x64xf32>, vector<16x64xf32> -> vector<16x64xf32>
    %18 = vector.broadcast %9 : vector<1x64xf32> to vector<16x64xf32>
    %19 = arith.addf %17, %18 : vector<16x64xf32>
    %20 = vector.extract_strided_slice %16 {offsets = [0, 0], sizes = [8, 32], strides = [1, 1]} : vector<16x32xf32> to vector<8x32xf32>
    %c0_18 = arith.constant 0 : index
    %c0_19 = arith.constant 0 : index
    %c0_20 = arith.constant 0 : index
    %21 = vector.load %arg5[%c0_18, %c0_19, %c0_20] : memref<2x8x32xf32, #tpu.memory_space<vmem>>, vector<1x8x32xf32>
    %22 = vector.shape_cast %21 : vector<1x8x32xf32> to vector<8x32xf32>
    %23 = vector.shape_cast %20 : vector<8x32xf32> to vector<1x8x32xf32>
    tpu.vector_store %arg5[%c0_18, %c0_19, %c0_20], %23 {strides = array<i32>} : memref<2x8x32xf32, #tpu.memory_space<vmem>>, vector<1x8x32xf32>,
    %24 = vector.extract_strided_slice %16 {offsets = [8, 0], sizes = [8, 32], strides = [1, 1]} : vector<16x32xf32> to vector<8x32xf32>
    %c1_21 = arith.constant 1 : index
    %c0_22 = arith.constant 0 : index
    %c0_23 = arith.constant 0 : index
    %25 = vector.load %arg5[%c1_21, %c0_22, %c0_23] : memref<2x8x32xf32, #tpu.memory_space<vmem>>, vector<1x8x32xf32>
    %26 = vector.shape_cast %25 : vector<1x8x32xf32> to vector<8x32xf32>
    %27 = vector.shape_cast %24 : vector<8x32xf32> to vector<1x8x32xf32>
    tpu.vector_store %arg5[%c1_21, %c0_22, %c0_23], %27 {strides = array<i32>} : memref<2x8x32xf32, #tpu.memory_space<vmem>>, vector<1x8x32xf32>,
    %cst_24 = arith.constant 0.000000e+00 : f32
    %28 = vector.broadcast %cst_24 : f32 to vector<8x32xf32>
    %cst_25 = arith.constant 0.000000e+00 : f32
    %29 = vector.broadcast %cst_25 : f32 to vector<8x32xf32>
    %30 = vector.extract_strided_slice %16 {offsets = [0, 0], sizes = [16, 8], strides = [1, 1]} : vector<16x32xf32> to vector<16x8xf32>
    %31 = vector.extract_strided_slice %19 {offsets = [0, 0], sizes = [16, 8], strides = [1, 1]} : vector<16x64xf32> to vector<16x8xf32>
    %32 = vector.extract_strided_slice %19 {offsets = [0, 32], sizes = [16, 8], strides = [1, 1]} : vector<16x64xf32> to vector<16x8xf32>
    %33 = vector.extract_strided_slice %11 {offsets = [0, 0], sizes = [8, 32], strides = [1, 1]} : vector<32x32xf32> to vector<8x32xf32>
    %cst_26 = arith.constant dense<0.000000e+00> : vector<16x32xf32>
    %34 = tpu.matmul %32, %33, %cst_26 {dimension_numbers = #tpu.dot_dimension_numbers<[1], [0], [0], [1], [0, 0, 1, 1], [], []>} : vector<16x8xf32>, vector<8x32xf32>, vector<16x32xf32> -> vector<16x32xf32>
    %35 = vector.extract_strided_slice %30 {offsets = [0, 0], sizes = [8, 8], strides = [1, 1]} : vector<16x8xf32> to vector<8x8xf32>
    %36 = vector.extract_strided_slice %31 {offsets = [0, 0], sizes = [8, 8], strides = [1, 1]} : vector<16x8xf32> to vector<8x8xf32>
    %cst_27 = arith.constant dense<0.000000e+00> : vector<8x8xf32>
    %37 = tpu.matmul %35, %36, %cst_27 {dimension_numbers = #tpu.dot_dimension_numbers<[1], [1], [0], [0], [0, 0, 1, 0], [], []>} : vector<8x8xf32>, vector<8x8xf32>, vector<8x8xf32> -> vector<8x8xf32>
    %cst_28 = arith.constant dense<0xFF800000> : vector<8xf32>
    %38 = vector.multi_reduction <maximumf>, %37, %cst_28 [0] : vector<8x8xf32> to vector<8xf32>
    %39 = vector.shape_cast %38 : vector<8xf32> to vector<1x8xf32>
    %40 = vector.broadcast %39 : vector<1x8xf32> to vector<8x8xf32>
    %41 = arith.subf %37, %40 : vector<8x8xf32>
    %42 = math.exp %41 : vector<8x8xf32>
    %cst_29 = arith.constant dense<0.000000e+00> : vector<8xf32>
    %43 = vector.multi_reduction <add>, %42, %cst_29 [0] : vector<8x8xf32> to vector<8xf32>
    %44 = vector.shape_cast %43 : vector<8xf32> to vector<1x8xf32>
    %45 = tpu.reciprocal %44 {approx = true} : vector<1x8xf32> -> vector<1x8xf32>
    %46 = vector.broadcast %45 : vector<1x8xf32> to vector<8x8xf32>
    %47 = arith.mulf %42, %46 : vector<8x8xf32>
    %48 = vector.extract_strided_slice %34 {offsets = [0, 0], sizes = [8, 32], strides = [1, 1]} : vector<16x32xf32> to vector<8x32xf32>
    %cst_30 = arith.constant dense<0.000000e+00> : vector<8x32xf32>
    %49 = tpu.matmul %47, %48, %cst_30 {dimension_numbers = #tpu.dot_dimension_numbers<[1], [0], [0], [1], [0, 0, 1, 1], [], []>} : vector<8x8xf32>, vector<8x32xf32>, vector<8x32xf32> -> vector<8x32xf32>
    %50 = arith.addf %28, %49 : vector<8x32xf32>
    %51 = vector.extract_strided_slice %30 {offsets = [8, 0], sizes = [8, 8], strides = [1, 1]} : vector<16x8xf32> to vector<8x8xf32>
    %52 = vector.extract_strided_slice %31 {offsets = [8, 0], sizes = [8, 8], strides = [1, 1]} : vector<16x8xf32> to vector<8x8xf32>
    %cst_31 = arith.constant dense<0.000000e+00> : vector<8x8xf32>
    %53 = tpu.matmul %51, %52, %cst_31 {dimension_numbers = #tpu.dot_dimension_numbers<[1], [1], [0], [0], [0, 0, 1, 0], [], []>} : vector<8x8xf32>, vector<8x8xf32>, vector<8x8xf32> -> vector<8x8xf32>
    %cst_32 = arith.constant dense<0xFF800000> : vector<8xf32>
    %54 = vector.multi_reduction <maximumf>, %53, %cst_32 [0] : vector<8x8xf32> to vector<8xf32>
    %55 = vector.shape_cast %54 : vector<8xf32> to vector<1x8xf32>
    %56 = vector.broadcast %55 : vector<1x8xf32> to vector<8x8xf32>
    %57 = arith.subf %53, %56 : vector<8x8xf32>
    %58 = math.exp %57 : vector<8x8xf32>
    %cst_33 = arith.constant dense<0.000000e+00> : vector<8xf32>
    %59 = vector.multi_reduction <add>, %58, %cst_33 [0] : vector<8x8xf32> to vector<8xf32>
    %60 = vector.shape_cast %59 : vector<8xf32> to vector<1x8xf32>
    %61 = tpu.reciprocal %60 {approx = true} : vector<1x8xf32> -> vector<1x8xf32>
    %62 = vector.broadcast %61 : vector<1x8xf32> to vector<8x8xf32>
    %63 = arith.mulf %58, %62 : vector<8x8xf32>
    %64 = vector.extract_strided_slice %34 {offsets = [8, 0], sizes = [8, 32], strides = [1, 1]} : vector<16x32xf32> to vector<8x32xf32>
    %cst_34 = arith.constant dense<0.000000e+00> : vector<8x32xf32>
    %65 = tpu.matmul %63, %64, %cst_34 {dimension_numbers = #tpu.dot_dimension_numbers<[1], [0], [0], [1], [0, 0, 1, 1], [], []>} : vector<8x8xf32>, vector<8x32xf32>, vector<8x32xf32> -> vector<8x32xf32>
    %66 = arith.addf %29, %65 : vector<8x32xf32>
    %67 = vector.extract_strided_slice %16 {offsets = [0, 8], sizes = [16, 8], strides = [1, 1]} : vector<16x32xf32> to vector<16x8xf32>
    %68 = vector.extract_strided_slice %19 {offsets = [0, 8], sizes = [16, 8], strides = [1, 1]} : vector<16x64xf32> to vector<16x8xf32>
    %69 = vector.extract_strided_slice %19 {offsets = [0, 40], sizes = [16, 8], strides = [1, 1]} : vector<16x64xf32> to vector<16x8xf32>
    %70 = vector.extract_strided_slice %11 {offsets = [8, 0], sizes = [8, 32], strides = [1, 1]} : vector<32x32xf32> to vector<8x32xf32>
    %cst_35 = arith.constant dense<0.000000e+00> : vector<16x32xf32>
    %71 = tpu.matmul %69, %70, %cst_35 {dimension_numbers = #tpu.dot_dimension_numbers<[1], [0], [0], [1], [0, 0, 1, 1], [], []>} : vector<16x8xf32>, vector<8x32xf32>, vector<16x32xf32> -> vector<16x32xf32>
    %72 = vector.extract_strided_slice %67 {offsets = [0, 0], sizes = [8, 8], strides = [1, 1]} : vector<16x8xf32> to vector<8x8xf32>
    %73 = vector.extract_strided_slice %68 {offsets = [0, 0], sizes = [8, 8], strides = [1, 1]} : vector<16x8xf32> to vector<8x8xf32>
    %cst_36 = arith.constant dense<0.000000e+00> : vector<8x8xf32>
    %74 = tpu.matmul %72, %73, %cst_36 {dimension_numbers = #tpu.dot_dimension_numbers<[1], [1], [0], [0], [0, 0, 1, 0], [], []>} : vector<8x8xf32>, vector<8x8xf32>, vector<8x8xf32> -> vector<8x8xf32>
    %cst_37 = arith.constant dense<0xFF800000> : vector<8xf32>
    %75 = vector.multi_reduction <maximumf>, %74, %cst_37 [0] : vector<8x8xf32> to vector<8xf32>
    %76 = vector.shape_cast %75 : vector<8xf32> to vector<1x8xf32>
    %77 = vector.broadcast %76 : vector<1x8xf32> to vector<8x8xf32>
    %78 = arith.subf %74, %77 : vector<8x8xf32>
    %79 = math.exp %78 : vector<8x8xf32>
    %cst_38 = arith.constant dense<0.000000e+00> : vector<8xf32>
    %80 = vector.multi_reduction <add>, %79, %cst_38 [0] : vector<8x8xf32> to vector<8xf32>
    %81 = vector.shape_cast %80 : vector<8xf32> to vector<1x8xf32>
    %82 = tpu.reciprocal %81 {approx = true} : vector<1x8xf32> -> vector<1x8xf32>
    %83 = vector.broadcast %82 : vector<1x8xf32> to vector<8x8xf32>
    %84 = arith.mulf %79, %83 : vector<8x8xf32>
    %85 = vector.extract_strided_slice %71 {offsets = [0, 0], sizes = [8, 32], strides = [1, 1]} : vector<16x32xf32> to vector<8x32xf32>
    %cst_39 = arith.constant dense<0.000000e+00> : vector<8x32xf32>
    %86 = tpu.matmul %84, %85, %cst_39 {dimension_numbers = #tpu.dot_dimension_numbers<[1], [0], [0], [1], [0, 0, 1, 1], [], []>} : vector<8x8xf32>, vector<8x32xf32>, vector<8x32xf32> -> vector<8x32xf32>
    %87 = arith.addf %50, %86 : vector<8x32xf32>
    %88 = vector.extract_strided_slice %67 {offsets = [8, 0], sizes = [8, 8], strides = [1, 1]} : vector<16x8xf32> to vector<8x8xf32>
    %89 = vector.extract_strided_slice %68 {offsets = [8, 0], sizes = [8, 8], strides = [1, 1]} : vector<16x8xf32> to vector<8x8xf32>
    %cst_40 = arith.constant dense<0.000000e+00> : vector<8x8xf32>
    %90 = tpu.matmul %88, %89, %cst_40 {dimension_numbers = #tpu.dot_dimension_numbers<[1], [1], [0], [0], [0, 0, 1, 0], [], []>} : vector<8x8xf32>, vector<8x8xf32>, vector<8x8xf32> -> vector<8x8xf32>
    %cst_41 = arith.constant dense<0xFF800000> : vector<8xf32>
    %91 = vector.multi_reduction <maximumf>, %90, %cst_41 [0] : vector<8x8xf32> to vector<8xf32>
    %92 = vector.shape_cast %91 : vector<8xf32> to vector<1x8xf32>
    %93 = vector.broadcast %92 : vector<1x8xf32> to vector<8x8xf32>
    %94 = arith.subf %90, %93 : vector<8x8xf32>
    %95 = math.exp %94 : vector<8x8xf32>
    %cst_42 = arith.constant dense<0.000000e+00> : vector<8xf32>
    %96 = vector.multi_reduction <add>, %95, %cst_42 [0] : vector<8x8xf32> to vector<8xf32>
    %97 = vector.shape_cast %96 : vector<8xf32> to vector<1x8xf32>
    %98 = tpu.reciprocal %97 {approx = true} : vector<1x8xf32> -> vector<1x8xf32>
    %99 = vector.broadcast %98 : vector<1x8xf32> to vector<8x8xf32>
    %100 = arith.mulf %95, %99 : vector<8x8xf32>
    %101 = vector.extract_strided_slice %71 {offsets = [8, 0], sizes = [8, 32], strides = [1, 1]} : vector<16x32xf32> to vector<8x32xf32>
    %cst_43 = arith.constant dense<0.000000e+00> : vector<8x32xf32>
    %102 = tpu.matmul %100, %101, %cst_43 {dimension_numbers = #tpu.dot_dimension_numbers<[1], [0], [0], [1], [0, 0, 1, 1], [], []>} : vector<8x8xf32>, vector<8x32xf32>, vector<8x32xf32> -> vector<8x32xf32>
    %103 = arith.addf %66, %102 : vector<8x32xf32>
    %104 = vector.extract_strided_slice %16 {offsets = [0, 16], sizes = [16, 8], strides = [1, 1]} : vector<16x32xf32> to vector<16x8xf32>
    %105 = vector.extract_strided_slice %19 {offsets = [0, 16], sizes = [16, 8], strides = [1, 1]} : vector<16x64xf32> to vector<16x8xf32>
    %106 = vector.extract_strided_slice %19 {offsets = [0, 48], sizes = [16, 8], strides = [1, 1]} : vector<16x64xf32> to vector<16x8xf32>
    %107 = vector.extract_strided_slice %11 {offsets = [16, 0], sizes = [8, 32], strides = [1, 1]} : vector<32x32xf32> to vector<8x32xf32>
    %cst_44 = arith.constant dense<0.000000e+00> : vector<16x32xf32>
    %108 = tpu.matmul %106, %107, %cst_44 {dimension_numbers = #tpu.dot_dimension_numbers<[1], [0], [0], [1], [0, 0, 1, 1], [], []>} : vector<16x8xf32>, vector<8x32xf32>, vector<16x32xf32> -> vector<16x32xf32>
    %109 = vector.extract_strided_slice %104 {offsets = [0, 0], sizes = [8, 8], strides = [1, 1]} : vector<16x8xf32> to vector<8x8xf32>
    %110 = vector.extract_strided_slice %105 {offsets = [0, 0], sizes = [8, 8], strides = [1, 1]} : vector<16x8xf32> to vector<8x8xf32>
    %cst_45 = arith.constant dense<0.000000e+00> : vector<8x8xf32>
    %111 = tpu.matmul %109, %110, %cst_45 {dimension_numbers = #tpu.dot_dimension_numbers<[1], [1], [0], [0], [0, 0, 1, 0], [], []>} : vector<8x8xf32>, vector<8x8xf32>, vector<8x8xf32> -> vector<8x8xf32>
    %cst_46 = arith.constant dense<0xFF800000> : vector<8xf32>
    %112 = vector.multi_reduction <maximumf>, %111, %cst_46 [0] : vector<8x8xf32> to vector<8xf32>
    %113 = vector.shape_cast %112 : vector<8xf32> to vector<1x8xf32>
    %114 = vector.broadcast %113 : vector<1x8xf32> to vector<8x8xf32>
    %115 = arith.subf %111, %114 : vector<8x8xf32>
    %116 = math.exp %115 : vector<8x8xf32>
    %cst_47 = arith.constant dense<0.000000e+00> : vector<8xf32>
    %117 = vector.multi_reduction <add>, %116, %cst_47 [0] : vector<8x8xf32> to vector<8xf32>
    %118 = vector.shape_cast %117 : vector<8xf32> to vector<1x8xf32>
    %119 = tpu.reciprocal %118 {approx = true} : vector<1x8xf32> -> vector<1x8xf32>
    %120 = vector.broadcast %119 : vector<1x8xf32> to vector<8x8xf32>
    %121 = arith.mulf %116, %120 : vector<8x8xf32>
    %122 = vector.extract_strided_slice %108 {offsets = [0, 0], sizes = [8, 32], strides = [1, 1]} : vector<16x32xf32> to vector<8x32xf32>
    %cst_48 = arith.constant dense<0.000000e+00> : vector<8x32xf32>
    %123 = tpu.matmul %121, %122, %cst_48 {dimension_numbers = #tpu.dot_dimension_numbers<[1], [0], [0], [1], [0, 0, 1, 1], [], []>} : vector<8x8xf32>, vector<8x32xf32>, vector<8x32xf32> -> vector<8x32xf32>
    %124 = arith.addf %87, %123 : vector<8x32xf32>
    %125 = vector.extract_strided_slice %104 {offsets = [8, 0], sizes = [8, 8], strides = [1, 1]} : vector<16x8xf32> to vector<8x8xf32>
    %126 = vector.extract_strided_slice %105 {offsets = [8, 0], sizes = [8, 8], strides = [1, 1]} : vector<16x8xf32> to vector<8x8xf32>
    %cst_49 = arith.constant dense<0.000000e+00> : vector<8x8xf32>
    %127 = tpu.matmul %125, %126, %cst_49 {dimension_numbers = #tpu.dot_dimension_numbers<[1], [1], [0], [0], [0, 0, 1, 0], [], []>} : vector<8x8xf32>, vector<8x8xf32>, vector<8x8xf32> -> vector<8x8xf32>
    %cst_50 = arith.constant dense<0xFF800000> : vector<8xf32>
    %128 = vector.multi_reduction <maximumf>, %127, %cst_50 [0] : vector<8x8xf32> to vector<8xf32>
    %129 = vector.shape_cast %128 : vector<8xf32> to vector<1x8xf32>
    %130 = vector.broadcast %129 : vector<1x8xf32> to vector<8x8xf32>
    %131 = arith.subf %127, %130 : vector<8x8xf32>
    %132 = math.exp %131 : vector<8x8xf32>
    %cst_51 = arith.constant dense<0.000000e+00> : vector<8xf32>
    %133 = vector.multi_reduction <add>, %132, %cst_51 [0] : vector<8x8xf32> to vector<8xf32>
    %134 = vector.shape_cast %133 : vector<8xf32> to vector<1x8xf32>
    %135 = tpu.reciprocal %134 {approx = true} : vector<1x8xf32> -> vector<1x8xf32>
    %136 = vector.broadcast %135 : vector<1x8xf32> to vector<8x8xf32>
    %137 = arith.mulf %132, %136 : vector<8x8xf32>
    %138 = vector.extract_strided_slice %108 {offsets = [8, 0], sizes = [8, 32], strides = [1, 1]} : vector<16x32xf32> to vector<8x32xf32>
    %cst_52 = arith.constant dense<0.000000e+00> : vector<8x32xf32>
    %139 = tpu.matmul %137, %138, %cst_52 {dimension_numbers = #tpu.dot_dimension_numbers<[1], [0], [0], [1], [0, 0, 1, 1], [], []>} : vector<8x8xf32>, vector<8x32xf32>, vector<8x32xf32> -> vector<8x32xf32>
    %140 = arith.addf %103, %139 : vector<8x32xf32>
    %141 = vector.extract_strided_slice %16 {offsets = [0, 24], sizes = [16, 8], strides = [1, 1]} : vector<16x32xf32> to vector<16x8xf32>
    %142 = vector.extract_strided_slice %19 {offsets = [0, 24], sizes = [16, 8], strides = [1, 1]} : vector<16x64xf32> to vector<16x8xf32>
    %143 = vector.extract_strided_slice %19 {offsets = [0, 56], sizes = [16, 8], strides = [1, 1]} : vector<16x64xf32> to vector<16x8xf32>
    %144 = vector.extract_strided_slice %11 {offsets = [24, 0], sizes = [8, 32], strides = [1, 1]} : vector<32x32xf32> to vector<8x32xf32>
    %cst_53 = arith.constant dense<0.000000e+00> : vector<16x32xf32>
    %145 = tpu.matmul %143, %144, %cst_53 {dimension_numbers = #tpu.dot_dimension_numbers<[1], [0], [0], [1], [0, 0, 1, 1], [], []>} : vector<16x8xf32>, vector<8x32xf32>, vector<16x32xf32> -> vector<16x32xf32>
    %146 = vector.extract_strided_slice %141 {offsets = [0, 0], sizes = [8, 8], strides = [1, 1]} : vector<16x8xf32> to vector<8x8xf32>
    %147 = vector.extract_strided_slice %142 {offsets = [0, 0], sizes = [8, 8], strides = [1, 1]} : vector<16x8xf32> to vector<8x8xf32>
    %cst_54 = arith.constant dense<0.000000e+00> : vector<8x8xf32>
    %148 = tpu.matmul %146, %147, %cst_54 {dimension_numbers = #tpu.dot_dimension_numbers<[1], [1], [0], [0], [0, 0, 1, 0], [], []>} : vector<8x8xf32>, vector<8x8xf32>, vector<8x8xf32> -> vector<8x8xf32>
    %cst_55 = arith.constant dense<0xFF800000> : vector<8xf32>
    %149 = vector.multi_reduction <maximumf>, %148, %cst_55 [0] : vector<8x8xf32> to vector<8xf32>
    %150 = vector.shape_cast %149 : vector<8xf32> to vector<1x8xf32>
    %151 = vector.broadcast %150 : vector<1x8xf32> to vector<8x8xf32>
    %152 = arith.subf %148, %151 : vector<8x8xf32>
    %153 = math.exp %152 : vector<8x8xf32>
    %cst_56 = arith.constant dense<0.000000e+00> : vector<8xf32>
    %154 = vector.multi_reduction <add>, %153, %cst_56 [0] : vector<8x8xf32> to vector<8xf32>
    %155 = vector.shape_cast %154 : vector<8xf32> to vector<1x8xf32>
    %156 = tpu.reciprocal %155 {approx = true} : vector<1x8xf32> -> vector<1x8xf32>
    %157 = vector.broadcast %156 : vector<1x8xf32> to vector<8x8xf32>
    %158 = arith.mulf %153, %157 : vector<8x8xf32>
    %159 = vector.extract_strided_slice %145 {offsets = [0, 0], sizes = [8, 32], strides = [1, 1]} : vector<16x32xf32> to vector<8x32xf32>
    %cst_57 = arith.constant dense<0.000000e+00> : vector<8x32xf32>
    %160 = tpu.matmul %158, %159, %cst_57 {dimension_numbers = #tpu.dot_dimension_numbers<[1], [0], [0], [1], [0, 0, 1, 1], [], []>} : vector<8x8xf32>, vector<8x32xf32>, vector<8x32xf32> -> vector<8x32xf32>
    %161 = arith.addf %124, %160 : vector<8x32xf32>
    %162 = vector.extract_strided_slice %141 {offsets = [8, 0], sizes = [8, 8], strides = [1, 1]} : vector<16x8xf32> to vector<8x8xf32>
    %163 = vector.extract_strided_slice %142 {offsets = [8, 0], sizes = [8, 8], strides = [1, 1]} : vector<16x8xf32> to vector<8x8xf32>
    %cst_58 = arith.constant dense<0.000000e+00> : vector<8x8xf32>
    %164 = tpu.matmul %162, %163, %cst_58 {dimension_numbers = #tpu.dot_dimension_numbers<[1], [1], [0], [0], [0, 0, 1, 0], [], []>} : vector<8x8xf32>, vector<8x8xf32>, vector<8x8xf32> -> vector<8x8xf32>
    %cst_59 = arith.constant dense<0xFF800000> : vector<8xf32>
    %165 = vector.multi_reduction <maximumf>, %164, %cst_59 [0] : vector<8x8xf32> to vector<8xf32>
    %166 = vector.shape_cast %165 : vector<8xf32> to vector<1x8xf32>
    %167 = vector.broadcast %166 : vector<1x8xf32> to vector<8x8xf32>
    %168 = arith.subf %164, %167 : vector<8x8xf32>
    %169 = math.exp %168 : vector<8x8xf32>
    %cst_60 = arith.constant dense<0.000000e+00> : vector<8xf32>
    %170 = vector.multi_reduction <add>, %169, %cst_60 [0] : vector<8x8xf32> to vector<8xf32>
    %171 = vector.shape_cast %170 : vector<8xf32> to vector<1x8xf32>
    %172 = tpu.reciprocal %171 {approx = true} : vector<1x8xf32> -> vector<1x8xf32>
    %173 = vector.broadcast %172 : vector<1x8xf32> to vector<8x8xf32>
    %174 = arith.mulf %169, %173 : vector<8x8xf32>
    %175 = vector.extract_strided_slice %145 {offsets = [8, 0], sizes = [8, 32], strides = [1, 1]} : vector<16x32xf32> to vector<8x32xf32>
    %cst_61 = arith.constant dense<0.000000e+00> : vector<8x32xf32>
    %176 = tpu.matmul %174, %175, %cst_61 {dimension_numbers = #tpu.dot_dimension_numbers<[1], [0], [0], [1], [0, 0, 1, 1], [], []>} : vector<8x8xf32>, vector<8x32xf32>, vector<8x32xf32> -> vector<8x32xf32>
    %177 = arith.addf %140, %176 : vector<8x32xf32>
    %178 = vector.broadcast %13 : vector<1x32xf32> to vector<8x32xf32>
    %179 = arith.addf %161, %178 : vector<8x32xf32>
    %c0_62 = arith.constant 0 : index
    %c0_63 = arith.constant 0 : index
    %c0_64 = arith.constant 0 : index
    %180 = vector.load %arg4[%c0_62, %c0_63, %c0_64] : memref<2x8x32xf32, #tpu.memory_space<vmem>>, vector<1x8x32xf32>
    %181 = vector.shape_cast %180 : vector<1x8x32xf32> to vector<8x32xf32>
    %182 = vector.shape_cast %179 : vector<8x32xf32> to vector<1x8x32xf32>
    tpu.vector_store %arg4[%c0_62, %c0_63, %c0_64], %182 {strides = array<i32>} : memref<2x8x32xf32, #tpu.memory_space<vmem>>, vector<1x8x32xf32>,
    %183 = vector.broadcast %13 : vector<1x32xf32> to vector<8x32xf32>
    %184 = arith.addf %177, %183 : vector<8x32xf32>
    %c1_65 = arith.constant 1 : index
    %c0_66 = arith.constant 0 : index
    %c0_67 = arith.constant 0 : index
    %185 = vector.load %arg4[%c1_65, %c0_66, %c0_67] : memref<2x8x32xf32, #tpu.memory_space<vmem>>, vector<1x8x32xf32>
    %186 = vector.shape_cast %185 : vector<1x8x32xf32> to vector<8x32xf32>
    %187 = vector.shape_cast %184 : vector<8x32xf32> to vector<1x8x32xf32>
    tpu.vector_store %arg4[%c1_65, %c0_66, %c0_67], %187 {strides = array<i32>} : memref<2x8x32xf32, #tpu.memory_space<vmem>>, vector<1x8x32xf32>,
    return
  }
  func.func @transform_0(%arg0: i32) -> (i32, i32) {
    %c0_i32 = arith.constant 0 : i32
    %c0_i32_0 = arith.constant 0 : i32
    %c0_i32_1 = arith.constant 0 : i32
    return %c0_i32, %c0_i32_0 : i32, i32
  }
  func.func @transform_1(%arg0: i32) -> (i32, i32) {
    %c0_i32 = arith.constant 0 : i32
    %c0_i32_0 = arith.constant 0 : i32
    %c0_i32_1 = arith.constant 0 : i32
    return %c0_i32, %c0_i32_0 : i32, i32
  }
  func.func @transform_2(%arg0: i32) -> (i32, i32, i32) {
    %c0_i32 = arith.constant 0 : i32
    %c0_i32_0 = arith.constant 0 : i32
    %c0_i32_1 = arith.constant 0 : i32
    %c0_i32_2 = arith.constant 0 : i32
    return %c0_i32, %c0_i32_0, %c0_i32_1 : i32, i32, i32
  }
  func.func @transform_3(%arg0: i32) -> (i32, i32, i32) {
    %c0_i32 = arith.constant 0 : i32
    %c0_i32_0 = arith.constant 0 : i32
    %c0_i32_1 = arith.constant 0 : i32
    %c0_i32_2 = arith.constant 0 : i32
    return %c0_i32, %c0_i32_0, %c0_i32_1 : i32, i32, i32
  }
  func.func @transform_4(%arg0: i32) -> (i32, i32, i32) {
    %c0_i32 = arith.constant 0 : i32
    %c0_i32_0 = arith.constant 0 : i32
    %c0_i32_1 = arith.constant 0 : i32
    %c0_i32_2 = arith.constant 0 : i32
    return %c0_i32, %c0_i32_0, %c0_i32_1 : i32, i32, i32
  }
}

</mosaic_0001>

<llo_original>
// kernel: med_pose_attention.1
$region0: #{med_pose_attention.1}
  #allocation0 [shape = 'u32[]', space=smem, size = 0x4, offset = 0x4, fixed_abs, tag = 'smem constant byte address 0x4 - core index']
  #allocation1 [shape = 'u32[72,128]{1,0:T(1,128)}', space=vmem, size = 0x9000, scoped, tag = 'internal scratch']
  %s0 = inlined_call_operand.vmem [shape: f32[16,16], index: 0, kind: input, shape index: {}]
  %s1 = inlined_call_operand.vmem [shape: f32[16,16], index: 1, kind: input, shape index: {}]
  %s2 = inlined_call_operand.vmem [shape: f32[3,40,64], index: 2, kind: input, shape index: {}]
  %s3 = inlined_call_operand.hbm [shape: f32[2,8,32], index: 3, kind: output, shape index: {0}]
  %s4 = inlined_call_operand.hbm [shape: f32[2,8,32], index: 4, kind: output, shape index: {1}]
  %5 = xla_tuple %s3, %s4
  %s6 = sld [smem:[#allocation0]]
  $region30: #{med_pose_attention.1} parent=0
    _
  %s8 = ssub.s32 1, %s6
  %s9 = scalar_select 0, %s8, %s6
  $region1: #{med_pose_attention.1} parent=0
    #allocation2 [shape = 'u8[8192]{0}', space=vmem, size = 0x2000, scoped, tag = 'output window, operand 0, single buffered']
    #allocation3 [shape = 's32[1]{0}', space=sflag, size = 0x4, scoped, tag = 'scoped memory for med_pose_attention.1']
    #allocation4 [shape = 'u8[8192]{0}', space=vmem, size = 0x2000, scoped, tag = 'output window, operand 1, single buffered']
    #allocation5 [shape = 's32[1]{0}', space=sflag, size = 0x4, scoped, tag = 'scoped memory for med_pose_attention.1']
    %10 = vsyncpa [#allocation3], 0
    %11 = vsyncpa [#allocation5], 0
    // Predicated region
    $region2: #{med_pose_attention.1} parent=1 // pred_check
      _
    $region3: #{med_pose_attention.1} parent=1 // pred_check_branch
      %13 = sbr.rel (0) target = $region5
    $region4: #{med_pose_attention.1} parent=1 // pred_region
      _
    $region5: #{med_pose_attention.1} parent=1 // pred_fallthru
      _
    // Predicated region
    $region6: #{med_pose_attention.1} parent=1 // pred_check
      _
    $region7: #{med_pose_attention.1} parent=1 // pred_check_branch
      %15 = sbr.rel (0) target = $region9
    $region8: #{med_pose_attention.1} parent=1 // pred_region
      _
    $region9: #{med_pose_attention.1} parent=1 // pred_fallthru
      _
    // Predicated region
    $region10: #{med_pose_attention.1} parent=1 // pred_check
      _
    $region11: #{med_pose_attention.1} parent=1 // pred_check_branch
      %17 = sbr.rel (0) target = $region13
    $region12: #{med_pose_attention.1} parent=1 // pred_region
      _
    $region13: #{med_pose_attention.1} parent=1 // pred_fallthru
      _
    %v18 = vld [vmem:[%s0] sm:$0xff]
    %v19 = vld [vmem:[%s0 + $0x8] sm:$0xff]
    %v20 = vld [vmem:[%s1] sm:$0xff]
    %v21 = vld [vmem:[%s1 + $0x8] sm:$0xff]
    %v22 = vld [vmem:[%s2] sm:$0xff]
    %v23 = vld [vmem:[%s2 + $0x8] sm:$0xff]
    %v24 = vld [vmem:[%s2 + $0x10] sm:$0x1]
    %s25 = scalar_lea.vmem %s2, 40
    %v26 = vld [vmem:[%s25] sm:$0xff]
    %v27 = vld [vmem:[%s25 + $0x8] sm:$0xff]
    %v28 = vld [vmem:[%s25 + $0x10] sm:$0x1]
    %s29 = scalar_lea.vmem %s2, 80
    %v30 = vld [vmem:[%s29] sm:$0xff]
    %v31 = vld [vmem:[%s29 + $0x8] sm:$0xff]
    %v32 = vld [vmem:[%s29 + $0x10] sm:$0xff]
    %v33 = vld [vmem:[%s29 + $0x18] sm:$0xff]
    %v34 = vld [vmem:[%s29 + $0x20] sm:$0x1]
    %v35 = vperm.slane %v24, 0
    %vm36 = vcmask 130048
    %v38 = vsel %vm36, %v18, 0
    %v41 = vsel %vm36, %v19, 0
    %43 = vmatpush.msra.mxu0 0.0
    %44 = vmatpush.msra.mxu0 0.0
    %45 = vmatpush.msra.mxu0 0.0
    %46 = vmatpush.msra.mxu0 0.0
    %47 = vmatpush.msra.mxu0 0.0
    %48 = vmatpush.msra.mxu0 0.0
    %49 = vmatpush.msra.mxu0 0.0
    %50 = vmatpush.msra.mxu0 0.0
    %51 = vmatpush.msra.mxu0 0.0
    %52 = vmatpush.msra.mxu0 0.0
    %53 = vmatpush.msra.mxu0 0.0
    %54 = vmatpush.msra.mxu0 0.0
    %55 = vmatpush.msra.mxu0 0.0
    %56 = vmatpush.msra.mxu0 0.0
    %57 = vmatpush.msra.mxu0 %v23
    %58 = vmatpush.msra.mxu0 %v22
    %59 = vmatmul.f32.gmra.mxu0 %v38
    %v60 = vpop.f32.mrf.mxu0
    %v61 = vadd.f32 %v35, %v60
    %62 = vmatmul.f32.gmra.mxu0 %v41
    %v63 = vpop.f32.mrf.mxu0
    %v64 = vadd.f32 %v35, %v63
    %65 = vdwg.mxu0
    %v66 = vperm.slane %v28, 0
    %v68 = vsel %vm36, %v20, 0
    %v71 = vsel %vm36, %v21, 0
    %73 = vmatpush.msra.mxu0 0.0
    %74 = vmatpush.msra.mxu0 0.0
    %75 = vmatpush.msra.mxu0 0.0
    %76 = vmatpush.msra.mxu0 0.0
    %77 = vmatpush.msra.mxu0 0.0
    %78 = vmatpush.msra.mxu0 0.0
    %79 = vmatpush.msra.mxu0 0.0
    %80 = vmatpush.msra.mxu0 0.0
    %81 = vmatpush.msra.mxu0 0.0
    %82 = vmatpush.msra.mxu0 0.0
    %83 = vmatpush.msra.mxu0 0.0
    %84 = vmatpush.msra.mxu0 0.0
    %85 = vmatpush.msra.mxu0 0.0
    %86 = vmatpush.msra.mxu0 0.0
    %87 = vmatpush.msra.mxu0 %v27
    %88 = vmatpush.msra.mxu0 %v26
    %89 = vmatmul.f32.gmra.mxu0 %v68
    %v90 = vpop.f32.mrf.mxu0
    %v91 = vadd.f32 %v66, %v90
    %92 = vmatmul.f32.gmra.mxu0 %v71
    %v93 = vpop.f32.mrf.mxu0
    %v94 = vadd.f32 %v66, %v93
    %95 = vdwg.mxu0
    %vm96 = vcmask 261120
    %97 = vst.msk [vmem:[#allocation4] sm:$0xff] %vm96, %v61
    %s98 = scalar_lea.vmem [#allocation4], 8
    %99 = vst.msk [vmem:[%s98] sm:$0xff] %vm96, %v64
    %102 = vrot.lane.b32.xlu0 %v91, 96
    %v103 = vpop.permute.xlu0 %102
    %104 = vrot.lane.b32.xlu0 %v94, 96
    %v105 = vpop.permute.xlu0 %104
    %vm106 = vcmask 64512
    %v107 = vsel %vm106, %v103, 0
    %v109 = vsel %vm106, %v105, 0
    %111 = vmatpush.msra.mxu0 0.0
    %112 = vmatpush.msra.mxu0 0.0
    %113 = vmatpush.msra.mxu0 0.0
    %114 = vmatpush.msra.mxu0 0.0
    %115 = vmatpush.msra.mxu0 0.0
    %116 = vmatpush.msra.mxu0 0.0
    %117 = vmatpush.msra.mxu0 0.0
    %118 = vmatpush.msra.mxu0 0.0
    %119 = vmatpush.msra.mxu0 0.0
    %120 = vmatpush.msra.mxu0 0.0
    %121 = vmatpush.msra.mxu0 0.0
    %122 = vmatpush.msra.mxu0 0.0
    %123 = vmatpush.msra.mxu0 0.0
    %124 = vmatpush.msra.mxu0 0.0
    %125 = vmatpush.msra.mxu0 0.0
    %126 = vmatpush.msra.mxu0 %v30
    %127 = vmatmul.f32.gmra.mxu0 %v107
    %v128 = vpop.f32.mrf.mxu0
    %v129 = vadd.f32 0.0, %v128
    %130 = vmatmul.f32.gmra.mxu0 %v109
    %v131 = vpop.f32.mrf.mxu0
    %v132 = vadd.f32 0.0, %v131
    %133 = vdwg.mxu0
    %v135 = vsel %vm106, %v61, 0
    %v137 = vsel %vm106, %v91, 0
    %139 = vmatpush.xpose.msra.mxu0 0.0
    %140 = vmatpush.xpose.msra.mxu0 0.0
    %141 = vmatpush.xpose.msra.mxu0 0.0
    %142 = vmatpush.xpose.msra.mxu0 0.0
    %143 = vmatpush.xpose.msra.mxu0 0.0
    %144 = vmatpush.xpose.msra.mxu0 0.0
    %145 = vmatpush.xpose.msra.mxu0 0.0
    %146 = vmatpush.xpose.msra.mxu0 0.0
    %147 = vmatpush.xpose.msra.mxu0 0.0
    %148 = vmatpush.xpose.msra.mxu0 0.0
    %149 = vmatpush.xpose.msra.mxu0 0.0
    %150 = vmatpush.xpose.msra.mxu0 0.0
    %151 = vmatpush.xpose.msra.mxu0 0.0
    %152 = vmatpush.xpose.msra.mxu0 0.0
    %153 = vmatpush.xpose.msra.mxu0 0.0
    %154 = vmatpush.xpose.msra.mxu0 %v137
    %155 = vmatmul.f32.gmra.mxu0 %v135
    %v156 = vpop.f32.mrf.mxu0
    %v157 = vadd.f32 0.0, %v156
    %158 = vdwg.mxu0
    %v159 = vsel %vm106, %v157, -inf
    %v160 = vrot.slane %v159, 4
    %v161 = vmax.f32 %v159, %v160
    %v162 = vrot.slane %v161, 2
    %v163 = vmax.f32 %v161, %v162
    %v164 = vrot.slane %v163, 1
    %v165 = vmax.f32 %v163, %v164
    %v166 = vsub.f32 %v157, %v165
    %v167 = vmul.f32 %v166, 1.442695
    %v168 = vpow.pop %v167
    %v169 = vsel %vm106, %v168, 0.0
    %v170 = vrot.slane %v169, 4
    %v171 = vadd.f32 %v169, %v170
    %v172 = vrot.slane %v171, 2
    %v173 = vadd.f32 %v171, %v172
    %v174 = vrot.slane %v173, 1
    %v175 = vadd.f32 %v173, %v174
    %v176 = vrcp.pop %v175
    %v177 = vmul.f32 %v168, %v176
    %v179 = vsel %vm106, %v64, 0
    %v181 = vsel %vm106, %v94, 0
    %183 = vmatpush.xpose.msra.mxu0 0.0
    %184 = vmatpush.xpose.msra.mxu0 0.0
    %185 = vmatpush.xpose.msra.mxu0 0.0
    %186 = vmatpush.xpose.msra.mxu0 0.0
    %187 = vmatpush.xpose.msra.mxu0 0.0
    %188 = vmatpush.xpose.msra.mxu0 0.0
    %189 = vmatpush.xpose.msra.mxu0 0.0
    %190 = vmatpush.xpose.msra.mxu0 0.0
    %191 = vmatpush.xpose.msra.mxu0 0.0
    %192 = vmatpush.xpose.msra.mxu0 0.0
    %193 = vmatpush.xpose.msra.mxu0 0.0
    %194 = vmatpush.xpose.msra.mxu0 0.0
    %195 = vmatpush.xpose.msra.mxu0 0.0
    %196 = vmatpush.xpose.msra.mxu0 0.0
    %197 = vmatpush.xpose.msra.mxu0 0.0
    %198 = vmatpush.xpose.msra.mxu0 %v181
    %199 = vmatmul.f32.gmra.mxu0 %v179
    %v200 = vpop.f32.mrf.mxu0
    %v201 = vadd.f32 0.0, %v200
    %202 = vdwg.mxu0
    %v203 = vsel %vm106, %v201, -inf
    %v204 = vrot.slane %v203, 4
    %v205 = vmax.f32 %v203, %v204
    %v206 = vrot.slane %v205, 2
    %v207 = vmax.f32 %v205, %v206
    %v208 = vrot.slane %v207, 1
    %v209 = vmax.f32 %v207, %v208
    %v210 = vsub.f32 %v201, %v209
    %v211 = vmul.f32 %v210, 1.442695
    %v212 = vpow.pop %v211
    %v213 = vsel %vm106, %v212, 0.0
    %v214 = vrot.slane %v213, 4
    %v215 = vadd.f32 %v213, %v214
    %v216 = vrot.slane %v215, 2
    %v217 = vadd.f32 %v215, %v216
    %v218 = vrot.slane %v217, 1
    %v219 = vadd.f32 %v217, %v218
    %v220 = vrcp.pop %v219
    %v221 = vmul.f32 %v212, %v220
    %222 = vrot.lane.b32.xlu0 %v91, 88
    %v223 = vpop.permute.xlu0 %222
    %224 = vrot.lane.b32.xlu0 %v94, 88
    %v225 = vpop.permute.xlu0 %224
    %v226 = vsel %vm106, %v223, 0
    %v228 = vsel %vm106, %v225, 0
    %230 = vmatpush.msra.mxu0 0.0
    %231 = vmatpush.msra.mxu0 0.0
    %232 = vmatpush.msra.mxu0 0.0
    %233 = vmatpush.msra.mxu0 0.0
    %234 = vmatpush.msra.mxu0 0.0
    %235 = vmatpush.msra.mxu0 0.0
    %236 = vmatpush.msra.mxu0 0.0
    %237 = vmatpush.msra.mxu0 0.0
    %238 = vmatpush.msra.mxu0 0.0
    %239 = vmatpush.msra.mxu0 0.0
    %240 = vmatpush.msra.mxu0 0.0
    %241 = vmatpush.msra.mxu0 0.0
    %242 = vmatpush.msra.mxu0 0.0
    %243 = vmatpush.msra.mxu0 0.0
    %244 = vmatpush.msra.mxu0 0.0
    %245 = vmatpush.msra.mxu0 %v31
    %246 = vmatmul.f32.gmra.mxu0 %v226
    %v247 = vpop.f32.mrf.mxu0
    %v248 = vadd.f32 0.0, %v247
    %249 = vmatmul.f32.gmra.mxu0 %v228
    %v250 = vpop.f32.mrf.mxu0
    %v251 = vadd.f32 0.0, %v250
    %252 = vdwg.mxu0
    %253 = vrot.lane.b32.xlu0 %v61, 120
    %v254 = vpop.permute.xlu0 %253
    %255 = vrot.lane.b32.xlu0 %v91, 120
    %v256 = vpop.permute.xlu0 %255
    %v257 = vsel %vm106, %v254, 0
    %v259 = vsel %vm106, %v256, 0
    %261 = vmatpush.xpose.msra.mxu0 0.0
    %262 = vmatpush.xpose.msra.mxu0 0.0
    %263 = vmatpush.xpose.msra.mxu0 0.0
    %264 = vmatpush.xpose.msra.mxu0 0.0
    %265 = vmatpush.xpose.msra.mxu0 0.0
    %266 = vmatpush.xpose.msra.mxu0 0.0
    %267 = vmatpush.xpose.msra.mxu0 0.0
    %268 = vmatpush.xpose.msra.mxu0 0.0
    %269 = vmatpush.xpose.msra.mxu0 0.0
    %270 = vmatpush.xpose.msra.mxu0 0.0
    %271 = vmatpush.xpose.msra.mxu0 0.0
    %272 = vmatpush.xpose.msra.mxu0 0.0
    %273 = vmatpush.xpose.msra.mxu0 0.0
    %274 = vmatpush.xpose.msra.mxu0 0.0
    %275 = vmatpush.xpose.msra.mxu0 0.0
    %276 = vmatpush.xpose.msra.mxu0 %v259
    %277 = vmatmul.f32.gmra.mxu0 %v257
    %v278 = vpop.f32.mrf.mxu0
    %v279 = vadd.f32 0.0, %v278
    %280 = vdwg.mxu0
    %v281 = vsel %vm106, %v279, -inf
    %v282 = vrot.slane %v281, 4
    %v283 = vmax.f32 %v281, %v282
    %v284 = vrot.slane %v283, 2
    %v285 = vmax.f32 %v283, %v284
    %v286 = vrot.slane %v285, 1
    %v287 = vmax.f32 %v285, %v286
    %v288 = vsub.f32 %v279, %v287
    %v289 = vmul.f32 %v288, 1.442695
    %v290 = vpow.pop %v289
    %v291 = vsel %vm106, %v290, 0.0
    %v292 = vrot.slane %v291, 4
    %v293 = vadd.f32 %v291, %v292
    %v294 = vrot.slane %v293, 2
    %v295 = vadd.f32 %v293, %v294
    %v296 = vrot.slane %v295, 1
    %v297 = vadd.f32 %v295, %v296
    %v298 = vrcp.pop %v297
    %v299 = vmul.f32 %v290, %v298
    %v301 = vsel %vm106, %v299, 0
    %303 = vmatpush.msra.mxu0 0.0
    %304 = vmatpush.msra.mxu0 0.0
    %305 = vmatpush.msra.mxu0 0.0
    %306 = vmatpush.msra.mxu0 0.0
    %307 = vmatpush.msra.mxu0 0.0
    %308 = vmatpush.msra.mxu0 0.0
    %309 = vmatpush.msra.mxu0 0.0
    %310 = vmatpush.msra.mxu0 0.0
    %311 = vmatpush.msra.mxu0 0.0
    %312 = vmatpush.msra.mxu0 0.0
    %313 = vmatpush.msra.mxu0 0.0
    %314 = vmatpush.msra.mxu0 0.0
    %315 = vmatpush.msra.mxu0 0.0
    %316 = vmatpush.msra.mxu0 0.0
    %317 = vmatpush.msra.mxu0 0.0
    %318 = vmatpush.msra.mxu0 %v248
    %319 = vmatmul.f32.gmra.mxu0 %v301
    %v320 = vpop.f32.mrf.mxu0
    %v321 = vadd.f32 0.0, %v320
    %322 = vdwg.mxu0
    %v324 = vsel %vm106, %v177, 0
    %326 = vmatpush.msra.mxu0 0.0
    %327 = vmatpush.msra.mxu0 0.0
    %328 = vmatpush.msra.mxu0 0.0
    %329 = vmatpush.msra.mxu0 0.0
    %330 = vmatpush.msra.mxu0 0.0
    %331 = vmatpush.msra.mxu0 0.0
    %332 = vmatpush.msra.mxu0 0.0
    %333 = vmatpush.msra.mxu0 0.0
    %334 = vmatpush.msra.mxu0 0.0
    %335 = vmatpush.msra.mxu0 0.0
    %336 = vmatpush.msra.mxu0 0.0
    %337 = vmatpush.msra.mxu0 0.0
    %338 = vmatpush.msra.mxu0 0.0
    %339 = vmatpush.msra.mxu0 0.0
    %340 = vmatpush.msra.mxu0 0.0
    %341 = vmatpush.msra.mxu0 %v129
    %342 = vmatmul.f32.gmra.mxu0 %v324
    %v343 = vpop.f32.mrf.mxu0
    %v344 = vadd.f32 %v321, %v343
    %345 = vdwg.mxu0
    %346 = vrot.lane.b32.xlu0 %v64, 120
    %v347 = vpop.permute.xlu0 %346
    %348 = vrot.lane.b32.xlu0 %v94, 120
    %v349 = vpop.permute.xlu0 %348
    %v350 = vsel %vm106, %v347, 0
    %v352 = vsel %vm106, %v349, 0
    %354 = vmatpush.xpose.msra.mxu0 0.0
    %355 = vmatpush.xpose.msra.mxu0 0.0
    %356 = vmatpush.xpose.msra.mxu0 0.0
    %357 = vmatpush.xpose.msra.mxu0 0.0
    %358 = vmatpush.xpose.msra.mxu0 0.0
    %359 = vmatpush.xpose.msra.mxu0 0.0
    %360 = vmatpush.xpose.msra.mxu0 0.0
    %361 = vmatpush.xpose.msra.mxu0 0.0
    %362 = vmatpush.xpose.msra.mxu0 0.0
    %363 = vmatpush.xpose.msra.mxu0 0.0
    %364 = vmatpush.xpose.msra.mxu0 0.0
    %365 = vmatpush.xpose.msra.mxu0 0.0
    %366 = vmatpush.xpose.msra.mxu0 0.0
    %367 = vmatpush.xpose.msra.mxu0 0.0
    %368 = vmatpush.xpose.msra.mxu0 0.0
    %369 = vmatpush.xpose.msra.mxu0 %v352
    %370 = vmatmul.f32.gmra.mxu0 %v350
    %v371 = vpop.f32.mrf.mxu0
    %v372 = vadd.f32 0.0, %v371
    %373 = vdwg.mxu0
    %v374 = vsel %vm106, %v372, -inf
    %v375 = vrot.slane %v374, 4
    %v376 = vmax.f32 %v374, %v375
    %v377 = vrot.slane %v376, 2
    %v378 = vmax.f32 %v376, %v377
    %v379 = vrot.slane %v378, 1
    %v380 = vmax.f32 %v378, %v379
    %v381 = vsub.f32 %v372, %v380
    %v382 = vmul.f32 %v381, 1.442695
    %v383 = vpow.pop %v382
    %v384 = vsel %vm106, %v383, 0.0
    %v385 = vrot.slane %v384, 4
    %v386 = vadd.f32 %v384, %v385
    %v387 = vrot.slane %v386, 2
    %v388 = vadd.f32 %v386, %v387
    %v389 = vrot.slane %v388, 1
    %v390 = vadd.f32 %v388, %v389
    %v391 = vrcp.pop %v390
    %v392 = vmul.f32 %v383, %v391
    %v394 = vsel %vm106, %v392, 0
    %396 = vmatpush.msra.mxu0 0.0
    %397 = vmatpush.msra.mxu0 0.0
    %398 = vmatpush.msra.mxu0 0.0
    %399 = vmatpush.msra.mxu0 0.0
    %400 = vmatpush.msra.mxu0 0.0
    %401 = vmatpush.msra.mxu0 0.0
    %402 = vmatpush.msra.mxu0 0.0
    %403 = vmatpush.msra.mxu0 0.0
    %404 = vmatpush.msra.mxu0 0.0
    %405 = vmatpush.msra.mxu0 0.0
    %406 = vmatpush.msra.mxu0 0.0
    %407 = vmatpush.msra.mxu0 0.0
    %408 = vmatpush.msra.mxu0 0.0
    %409 = vmatpush.msra.mxu0 0.0
    %410 = vmatpush.msra.mxu0 0.0
    %411 = vmatpush.msra.mxu0 %v251
    %412 = vmatmul.f32.gmra.mxu0 %v394
    %v413 = vpop.f32.mrf.mxu0
    %v414 = vadd.f32 0.0, %v413
    %415 = vdwg.mxu0
    %v417 = vsel %vm106, %v221, 0
    %419 = vmatpush.msra.mxu0 0.0
    %420 = vmatpush.msra.mxu0 0.0
    %421 = vmatpush.msra.mxu0 0.0
    %422 = vmatpush.msra.mxu0 0.0
    %423 = vmatpush.msra.mxu0 0.0
    %424 = vmatpush.msra.mxu0 0.0
    %425 = vmatpush.msra.mxu0 0.0
    %426 = vmatpush.msra.mxu0 0.0
    %427 = vmatpush.msra.mxu0 0.0
    %428 = vmatpush.msra.mxu0 0.0
    %429 = vmatpush.msra.mxu0 0.0
    %430 = vmatpush.msra.mxu0 0.0
    %431 = vmatpush.msra.mxu0 0.0
    %432 = vmatpush.msra.mxu0 0.0
    %433 = vmatpush.msra.mxu0 0.0
    %434 = vmatpush.msra.mxu0 %v132
    %435 = vmatmul.f32.gmra.mxu0 %v417
    %v436 = vpop.f32.mrf.mxu0
    %v437 = vadd.f32 %v414, %v436
    %438 = vdwg.mxu0
    %439 = vrot.lane.b32.xlu0 %v91, 80
    %v440 = vpop.permute.xlu0 %439
    %441 = vrot.lane.b32.xlu0 %v94, 80
    %v442 = vpop.permute.xlu0 %441
    %v443 = vsel %vm106, %v440, 0
    %v445 = vsel %vm106, %v442, 0
    %447 = vmatpush.msra.mxu0 0.0
    %448 = vmatpush.msra.mxu0 0.0
    %449 = vmatpush.msra.mxu0 0.0
    %450 = vmatpush.msra.mxu0 0.0
    %451 = vmatpush.msra.mxu0 0.0
    %452 = vmatpush.msra.mxu0 0.0
    %453 = vmatpush.msra.mxu0 0.0
    %454 = vmatpush.msra.mxu0 0.0
    %455 = vmatpush.msra.mxu0 0.0
    %456 = vmatpush.msra.mxu0 0.0
    %457 = vmatpush.msra.mxu0 0.0
    %458 = vmatpush.msra.mxu0 0.0
    %459 = vmatpush.msra.mxu0 0.0
    %460 = vmatpush.msra.mxu0 0.0
    %461 = vmatpush.msra.mxu0 0.0
    %462 = vmatpush.msra.mxu0 %v32
    %463 = vmatmul.f32.gmra.mxu0 %v443
    %v464 = vpop.f32.mrf.mxu0
    %v465 = vadd.f32 0.0, %v464
    %466 = vmatmul.f32.gmra.mxu0 %v445
    %v467 = vpop.f32.mrf.mxu0
    %v468 = vadd.f32 0.0, %v467
    %469 = vdwg.mxu0
    %470 = vrot.lane.b32.xlu0 %v61, 112
    %v471 = vpop.permute.xlu0 %470
    %472 = vrot.lane.b32.xlu0 %v91, 112
    %v473 = vpop.permute.xlu0 %472
    %v474 = vsel %vm106, %v471, 0
    %v476 = vsel %vm106, %v473, 0
    %478 = vmatpush.xpose.msra.mxu0 0.0
    %479 = vmatpush.xpose.msra.mxu0 0.0
    %480 = vmatpush.xpose.msra.mxu0 0.0
    %481 = vmatpush.xpose.msra.mxu0 0.0
    %482 = vmatpush.xpose.msra.mxu0 0.0
    %483 = vmatpush.xpose.msra.mxu0 0.0
    %484 = vmatpush.xpose.msra.mxu0 0.0
    %485 = vmatpush.xpose.msra.mxu0 0.0
    %486 = vmatpush.xpose.msra.mxu0 0.0
    %487 = vmatpush.xpose.msra.mxu0 0.0
    %488 = vmatpush.xpose.msra.mxu0 0.0
    %489 = vmatpush.xpose.msra.mxu0 0.0
    %490 = vmatpush.xpose.msra.mxu0 0.0
    %491 = vmatpush.xpose.msra.mxu0 0.0
    %492 = vmatpush.xpose.msra.mxu0 0.0
    %493 = vmatpush.xpose.msra.mxu0 %v476
    %494 = vmatmul.f32.gmra.mxu0 %v474
    %v495 = vpop.f32.mrf.mxu0
    %v496 = vadd.f32 0.0, %v495
    %497 = vdwg.mxu0
    %v498 = vsel %vm106, %v496, -inf
    %v499 = vrot.slane %v498, 4
    %v500 = vmax.f32 %v498, %v499
    %v501 = vrot.slane %v500, 2
    %v502 = vmax.f32 %v500, %v501
    %v503 = vrot.slane %v502, 1
    %v504 = vmax.f32 %v502, %v503
    %v505 = vsub.f32 %v496, %v504
    %v506 = vmul.f32 %v505, 1.442695
    %v507 = vpow.pop %v506
    %v508 = vsel %vm106, %v507, 0.0
    %v509 = vrot.slane %v508, 4
    %v510 = vadd.f32 %v508, %v509
    %v511 = vrot.slane %v510, 2
    %v512 = vadd.f32 %v510, %v511
    %v513 = vrot.slane %v512, 1
    %v514 = vadd.f32 %v512, %v513
    %v515 = vrcp.pop %v514
    %v516 = vmul.f32 %v507, %v515
    %v518 = vsel %vm106, %v516, 0
    %520 = vmatpush.msra.mxu0 0.0
    %521 = vmatpush.msra.mxu0 0.0
    %522 = vmatpush.msra.mxu0 0.0
    %523 = vmatpush.msra.mxu0 0.0
    %524 = vmatpush.msra.mxu0 0.0
    %525 = vmatpush.msra.mxu0 0.0
    %526 = vmatpush.msra.mxu0 0.0
    %527 = vmatpush.msra.mxu0 0.0
    %528 = vmatpush.msra.mxu0 0.0
    %529 = vmatpush.msra.mxu0 0.0
    %530 = vmatpush.msra.mxu0 0.0
    %531 = vmatpush.msra.mxu0 0.0
    %532 = vmatpush.msra.mxu0 0.0
    %533 = vmatpush.msra.mxu0 0.0
    %534 = vmatpush.msra.mxu0 0.0
    %535 = vmatpush.msra.mxu0 %v465
    %536 = vmatmul.f32.gmra.mxu0 %v518
    %v537 = vpop.f32.mrf.mxu0
    %v538 = vadd.f32 0.0, %v537
    %539 = vdwg.mxu0
    %v540 = vadd.f32 %v344, %v538
    %541 = vrot.lane.b32.xlu0 %v64, 112
    %v542 = vpop.permute.xlu0 %541
    %543 = vrot.lane.b32.xlu0 %v94, 112
    %v544 = vpop.permute.xlu0 %543
    %v545 = vsel %vm106, %v542, 0
    %v547 = vsel %vm106, %v544, 0
    %549 = vmatpush.xpose.msra.mxu0 0.0
    %550 = vmatpush.xpose.msra.mxu0 0.0
    %551 = vmatpush.xpose.msra.mxu0 0.0
    %552 = vmatpush.xpose.msra.mxu0 0.0
    %553 = vmatpush.xpose.msra.mxu0 0.0
    %554 = vmatpush.xpose.msra.mxu0 0.0
    %555 = vmatpush.xpose.msra.mxu0 0.0
    %556 = vmatpush.xpose.msra.mxu0 0.0
    %557 = vmatpush.xpose.msra.mxu0 0.0
    %558 = vmatpush.xpose.msra.mxu0 0.0
    %559 = vmatpush.xpose.msra.mxu0 0.0
    %560 = vmatpush.xpose.msra.mxu0 0.0
    %561 = vmatpush.xpose.msra.mxu0 0.0
    %562 = vmatpush.xpose.msra.mxu0 0.0
    %563 = vmatpush.xpose.msra.mxu0 0.0
    %564 = vmatpush.xpose.msra.mxu0 %v547
    %565 = vmatmul.f32.gmra.mxu0 %v545
    %v566 = vpop.f32.mrf.mxu0
    %v567 = vadd.f32 0.0, %v566
    %568 = vdwg.mxu0
    %v569 = vsel %vm106, %v567, -inf
    %v570 = vrot.slane %v569, 4
    %v571 = vmax.f32 %v569, %v570
    %v572 = vrot.slane %v571, 2
    %v573 = vmax.f32 %v571, %v572
    %v574 = vrot.slane %v573, 1
    %v575 = vmax.f32 %v573, %v574
    %v576 = vsub.f32 %v567, %v575
    %v577 = vmul.f32 %v576, 1.442695
    %v578 = vpow.pop %v577
    %v579 = vsel %vm106, %v578, 0.0
    %v580 = vrot.slane %v579, 4
    %v581 = vadd.f32 %v579, %v580
    %v582 = vrot.slane %v581, 2
    %v583 = vadd.f32 %v581, %v582
    %v584 = vrot.slane %v583, 1
    %v585 = vadd.f32 %v583, %v584
    %v586 = vrcp.pop %v585
    %v587 = vmul.f32 %v578, %v586
    %v589 = vsel %vm106, %v587, 0
    %591 = vmatpush.msra.mxu0 0.0
    %592 = vmatpush.msra.mxu0 0.0
    %593 = vmatpush.msra.mxu0 0.0
    %594 = vmatpush.msra.mxu0 0.0
    %595 = vmatpush.msra.mxu0 0.0
    %596 = vmatpush.msra.mxu0 0.0
    %597 = vmatpush.msra.mxu0 0.0
    %598 = vmatpush.msra.mxu0 0.0
    %599 = vmatpush.msra.mxu0 0.0
    %600 = vmatpush.msra.mxu0 0.0
    %601 = vmatpush.msra.mxu0 0.0
    %602 = vmatpush.msra.mxu0 0.0
    %603 = vmatpush.msra.mxu0 0.0
    %604 = vmatpush.msra.mxu0 0.0
    %605 = vmatpush.msra.mxu0 0.0
    %606 = vmatpush.msra.mxu0 %v468
    %607 = vmatmul.f32.gmra.mxu0 %v589
    %v608 = vpop.f32.mrf.mxu0
    %v609 = vadd.f32 0.0, %v608
    %610 = vdwg.mxu0
    %v611 = vadd.f32 %v437, %v609
    %612 = vrot.lane.b32.xlu0 %v91, 72
    %v613 = vpop.permute.xlu0 %612
    %614 = vrot.lane.b32.xlu0 %v94, 72
    %v615 = vpop.permute.xlu0 %614
    %v616 = vsel %vm106, %v613, 0
    %v618 = vsel %vm106, %v615, 0
    %620 = vmatpush.msra.mxu0 0.0
    %621 = vmatpush.msra.mxu0 0.0
    %622 = vmatpush.msra.mxu0 0.0
    %623 = vmatpush.msra.mxu0 0.0
    %624 = vmatpush.msra.mxu0 0.0
    %625 = vmatpush.msra.mxu0 0.0
    %626 = vmatpush.msra.mxu0 0.0
    %627 = vmatpush.msra.mxu0 0.0
    %628 = vmatpush.msra.mxu0 0.0
    %629 = vmatpush.msra.mxu0 0.0
    %630 = vmatpush.msra.mxu0 0.0
    %631 = vmatpush.msra.mxu0 0.0
    %632 = vmatpush.msra.mxu0 0.0
    %633 = vmatpush.msra.mxu0 0.0
    %634 = vmatpush.msra.mxu0 0.0
    %635 = vmatpush.msra.mxu0 %v33
    %636 = vmatmul.f32.gmra.mxu0 %v616
    %v637 = vpop.f32.mrf.mxu0
    %v638 = vadd.f32 0.0, %v637
    %639 = vmatmul.f32.gmra.mxu0 %v618
    %v640 = vpop.f32.mrf.mxu0
    %v641 = vadd.f32 0.0, %v640
    %642 = vdwg.mxu0
    %643 = vrot.lane.b32.xlu0 %v61, 104
    %v644 = vpop.permute.xlu0 %643
    %645 = vrot.lane.b32.xlu0 %v91, 104
    %v646 = vpop.permute.xlu0 %645
    %v647 = vsel %vm106, %v644, 0
    %v649 = vsel %vm106, %v646, 0
    %651 = vmatpush.xpose.msra.mxu0 0.0
    %652 = vmatpush.xpose.msra.mxu0 0.0
    %653 = vmatpush.xpose.msra.mxu0 0.0
    %654 = vmatpush.xpose.msra.mxu0 0.0
    %655 = vmatpush.xpose.msra.mxu0 0.0
    %656 = vmatpush.xpose.msra.mxu0 0.0
    %657 = vmatpush.xpose.msra.mxu0 0.0
    %658 = vmatpush.xpose.msra.mxu0 0.0
    %659 = vmatpush.xpose.msra.mxu0 0.0
    %660 = vmatpush.xpose.msra.mxu0 0.0
    %661 = vmatpush.xpose.msra.mxu0 0.0
    %662 = vmatpush.xpose.msra.mxu0 0.0
    %663 = vmatpush.xpose.msra.mxu0 0.0
    %664 = vmatpush.xpose.msra.mxu0 0.0
    %665 = vmatpush.xpose.msra.mxu0 0.0
    %666 = vmatpush.xpose.msra.mxu0 %v649
    %667 = vmatmul.f32.gmra.mxu0 %v647
    %v668 = vpop.f32.mrf.mxu0
    %v669 = vadd.f32 0.0, %v668
    %670 = vdwg.mxu0
    %v671 = vsel %vm106, %v669, -inf
    %v672 = vrot.slane %v671, 4
    %v673 = vmax.f32 %v671, %v672
    %v674 = vrot.slane %v673, 2
    %v675 = vmax.f32 %v673, %v674
    %v676 = vrot.slane %v675, 1
    %v677 = vmax.f32 %v675, %v676
    %v678 = vsub.f32 %v669, %v677
    %v679 = vmul.f32 %v678, 1.442695
    %v680 = vpow.pop %v679
    %v681 = vsel %vm106, %v680, 0.0
    %v682 = vrot.slane %v681, 4
    %v683 = vadd.f32 %v681, %v682
    %v684 = vrot.slane %v683, 2
    %v685 = vadd.f32 %v683, %v684
    %v686 = vrot.slane %v685, 1
    %v687 = vadd.f32 %v685, %v686
    %v688 = vrcp.pop %v687
    %v689 = vmul.f32 %v680, %v688
    %v691 = vsel %vm106, %v689, 0
    %693 = vmatpush.msra.mxu0 0.0
    %694 = vmatpush.msra.mxu0 0.0
    %695 = vmatpush.msra.mxu0 0.0
    %696 = vmatpush.msra.mxu0 0.0
    %697 = vmatpush.msra.mxu0 0.0
    %698 = vmatpush.msra.mxu0 0.0
    %699 = vmatpush.msra.mxu0 0.0
    %700 = vmatpush.msra.mxu0 0.0
    %701 = vmatpush.msra.mxu0 0.0
    %702 = vmatpush.msra.mxu0 0.0
    %703 = vmatpush.msra.mxu0 0.0
    %704 = vmatpush.msra.mxu0 0.0
    %705 = vmatpush.msra.mxu0 0.0
    %706 = vmatpush.msra.mxu0 0.0
    %707 = vmatpush.msra.mxu0 0.0
    %708 = vmatpush.msra.mxu0 %v638
    %709 = vmatmul.f32.gmra.mxu0 %v691
    %v710 = vpop.f32.mrf.mxu0
    %v711 = vadd.f32 0.0, %v710
    %712 = vdwg.mxu0
    %v713 = vadd.f32 %v540, %v711
    %714 = vrot.lane.b32.xlu0 %v64, 104
    %v715 = vpop.permute.xlu0 %714
    %716 = vrot.lane.b32.xlu0 %v94, 104
    %v717 = vpop.permute.xlu0 %716
    %v718 = vsel %vm106, %v715, 0
    %v720 = vsel %vm106, %v717, 0
    %722 = vmatpush.xpose.msra.mxu0 0.0
    %723 = vmatpush.xpose.msra.mxu0 0.0
    %724 = vmatpush.xpose.msra.mxu0 0.0
    %725 = vmatpush.xpose.msra.mxu0 0.0
    %726 = vmatpush.xpose.msra.mxu0 0.0
    %727 = vmatpush.xpose.msra.mxu0 0.0
    %728 = vmatpush.xpose.msra.mxu0 0.0
    %729 = vmatpush.xpose.msra.mxu0 0.0
    %730 = vmatpush.xpose.msra.mxu0 0.0
    %731 = vmatpush.xpose.msra.mxu0 0.0
    %732 = vmatpush.xpose.msra.mxu0 0.0
    %733 = vmatpush.xpose.msra.mxu0 0.0
    %734 = vmatpush.xpose.msra.mxu0 0.0
    %735 = vmatpush.xpose.msra.mxu0 0.0
    %736 = vmatpush.xpose.msra.mxu0 0.0
    %737 = vmatpush.xpose.msra.mxu0 %v720
    %738 = vmatmul.f32.gmra.mxu0 %v718
    %v739 = vpop.f32.mrf.mxu0
    %v740 = vadd.f32 0.0, %v739
    %741 = vdwg.mxu0
    %v742 = vsel %vm106, %v740, -inf
    %v743 = vrot.slane %v742, 4
    %v744 = vmax.f32 %v742, %v743
    %v745 = vrot.slane %v744, 2
    %v746 = vmax.f32 %v744, %v745
    %v747 = vrot.slane %v746, 1
    %v748 = vmax.f32 %v746, %v747
    %v749 = vsub.f32 %v740, %v748
    %v750 = vmul.f32 %v749, 1.442695
    %v751 = vpow.pop %v750
    %v752 = vsel %vm106, %v751, 0.0
    %v753 = vrot.slane %v752, 4
    %v754 = vadd.f32 %v752, %v753
    %v755 = vrot.slane %v754, 2
    %v756 = vadd.f32 %v754, %v755
    %v757 = vrot.slane %v756, 1
    %v758 = vadd.f32 %v756, %v757
    %v759 = vrcp.pop %v758
    %v760 = vmul.f32 %v751, %v759
    %v762 = vsel %vm106, %v760, 0
    %764 = vmatpush.msra.mxu0 0.0
    %765 = vmatpush.msra.mxu0 0.0
    %766 = vmatpush.msra.mxu0 0.0
    %767 = vmatpush.msra.mxu0 0.0
    %768 = vmatpush.msra.mxu0 0.0
    %769 = vmatpush.msra.mxu0 0.0
    %770 = vmatpush.msra.mxu0 0.0
    %771 = vmatpush.msra.mxu0 0.0
    %772 = vmatpush.msra.mxu0 0.0
    %773 = vmatpush.msra.mxu0 0.0
    %774 = vmatpush.msra.mxu0 0.0
    %775 = vmatpush.msra.mxu0 0.0
    %776 = vmatpush.msra.mxu0 0.0
    %777 = vmatpush.msra.mxu0 0.0
    %778 = vmatpush.msra.mxu0 0.0
    %779 = vmatpush.msra.mxu0 %v641
    %780 = vmatmul.f32.gmra.mxu0 %v762
    %v781 = vpop.f32.mrf.mxu0
    %v782 = vadd.f32 0.0, %v781
    %783 = vdwg.mxu0
    %v784 = vadd.f32 %v611, %v782
    %v785 = vperm.slane %v34, 0
    %v786 = vadd.f32 %v713, %v785
    %787 = vst.msk [vmem:[#allocation2] sm:$0xff] %vm96, %v786
    %v788 = vadd.f32 %v784, %v785
    %s789 = scalar_lea.vmem [#allocation2], 8
    %790 = vst.msk [vmem:[%s789] sm:$0xff] %vm96, %v788
    // Predicated region
    $region14: #{med_pose_attention.1} parent=1 // pred_check
      _
    $region15: #{med_pose_attention.1} parent=1 // pred_check_branch
      %792 = sbr.rel (0) target = $region17
    $region16: #{med_pose_attention.1} parent=1 // pred_region
      %794 = vsyncadd [#allocation3], 0
      %s795 = sshll.u32 [#allocation2], 4
      %s796 = int_to_ptr.vmem [resolvable:$true] %s795
      %s797 = sshll.u32 %s3, 4
      %s798 = int_to_ptr.hbm [resolvable:$true] %s797
      %803 = dma.vmem_to_hbm [thread:$0]  %s796, 256, %s798, [#allocation3], 128, 128, 8
    $region17: #{med_pose_attention.1} parent=1 // pred_fallthru
      _
    // Predicated region
    $region18: #{med_pose_attention.1} parent=1 // pred_check
      _
    $region19: #{med_pose_attention.1} parent=1 // pred_check_branch
      %805 = sbr.rel (0) target = $region21
    $region20: #{med_pose_attention.1} parent=1 // pred_region
      %807 = vsyncadd [#allocation5], 0
      %s808 = sshll.u32 [#allocation4], 4
      %s809 = int_to_ptr.vmem [resolvable:$true] %s808
      %s810 = sshll.u32 %s4, 4
      %s811 = int_to_ptr.hbm [resolvable:$true] %s810
      %816 = dma.vmem_to_hbm [thread:$0]  %s809, 256, %s811, [#allocation5], 128, 128, 8
    $region21: #{med_pose_attention.1} parent=1 // pred_fallthru
      _
    // Predicated region
    $region22: #{med_pose_attention.1} parent=1 // pred_check
      _
    $region23: #{med_pose_attention.1} parent=1 // pred_check_branch
      %818 = sbr.rel (0) target = $region25
    $region24: #{med_pose_attention.1} parent=1 // pred_region
      %820 = dma.done [#allocation3], 256
    $region25: #{med_pose_attention.1} parent=1 // pred_fallthru
      _
    // Predicated region
    $region26: #{med_pose_attention.1} parent=1 // pred_check
      _
    $region27: #{med_pose_attention.1} parent=1 // pred_check_branch
      %822 = sbr.rel (0) target = $region29
    $region28: #{med_pose_attention.1} parent=1 // pred_region
      %824 = dma.done [#allocation5], 256
    $region29: #{med_pose_attention.1} parent=1 // pred_fallthru
      _
    %825 = vsyncpa [#allocation3], 1
    %826 = vsyncpa [#allocation5], 1

</llo_original>
